<compile_context>
chip_gen: v7x
topology: tpu7x:2x2x1
jax: 0.10.0
libtpu: 0.0.40
codegen_flags: <defaults>
</compile_context>

<pallas_src>
import functools

import jax
import jax.numpy as jnp
from jax import lax
from jax.experimental import pallas as pl
from jax.experimental.pallas import tpu as pltpu

GAMMA = 0.2


def _round_up(x, m):
    return ((x + m - 1) // m) * m


def _neuron_kernel(scalars_ref,      # SMEM (2,) f32 : [1/tau, v_reset]
                   deg_ref,          # VMEM (Npad, 1) int32 : binned degree (resident)
                   dv_ref,           # VMEM (RT, S) f32
                   v_ref,            # VMEM (RT, S) f32
                   vth_ref,          # VMEM (bins_p, S) f32
                   spike_ref,        # out  (RT, S) f32
                   vnew_ref,         # out  (RT, S) f32
                   binsum_ref,       # out  (bins_p, S) f32 : per-tile partial spike sums
                   count_ref,        # out  (1, bins_p) f32 : per-tile per-bin node counts
                   *, bins_p, row_tile):
    i = pl.program_id(0)

    inv_tau = scalars_ref[0]
    v_reset = scalars_ref[1]

    # Slice this tile's degrees out of the resident (Npad, 1) vector.
    start = pl.multiple_of(i * row_tile, row_tile)
    deg = deg_ref[pl.ds(start, row_tile), :]                          # (RT, 1) int32
    onehot = (deg == lax.broadcasted_iota(jnp.int32, (row_tile, bins_p), 1)
              ).astype(jnp.float32)                                   # (RT, bins_p)

    # Per-node threshold row via a small MXU matmul: one_hot @ v_threshold.
    thresh = jnp.dot(onehot, vth_ref[...],
                     preferred_element_type=jnp.float32)              # (RT, S)

    v_old = v_ref[...]
    v = v_old + (dv_ref[...] - v_old + v_reset) * inv_tau             # leaky integration
    spike_bool = v > thresh                                           # hard-threshold fwd
    spike = spike_bool.astype(jnp.float32)
    v_new = jnp.where(spike_bool, v_reset, v)                         # reset via select

    spike_ref[...] = spike
    vnew_ref[...] = v_new

    # Per-tile segmented reduction: (RT,bins_p)^T @ (RT,S) -> (bins_p,S)
    binsum_ref[...] = lax.dot_general(
        onehot, spike, dimension_numbers=(((0,), (0,)), ((), ())),
        preferred_element_type=jnp.float32)
    # Per-tile per-bin node counts (so the wrapper needs no scatter-add).
    count_ref[...] = jnp.sum(onehot, axis=0, keepdims=True)           # (1, bins_p)


@functools.partial(jax.jit, static_argnames=("row_tile",))
def deg_feat_neuron_forward(dv, v, binned_degree, v_threshold, tau, v_reset,
                            *, row_tile=512):
    """One forward step. Returns (spike, v_new, per_bin_spike_sum, per_bin_count)."""
    n, s = dv.shape
    bins = v_threshold.shape[0]

    # Tile / padding setup: big tiles for bandwidth, padded last tile instead
    # of an exact-divisibility requirement.  Out-of-range padded degrees (-1)
    # produce an all-zero one-hot row, so they never contribute to bin sums.
    rt = min(row_tile, _round_up(n, 8))
    n_pad = _round_up(n, rt)
    num_tiles = n_pad // rt
    bins_p = _round_up(bins, 8)

    deg = binned_degree.astype(jnp.int32)
    if n_pad != n:
        pad = n_pad - n
        dv = jnp.pad(dv, ((0, pad), (0, 0)))
        v = jnp.pad(v, ((0, pad), (0, 0)))
        deg = jnp.pad(deg, (0, pad), constant_values=-1)
    deg2d = deg.reshape(n_pad, 1)

    vth = v_threshold
    if bins_p != bins:
        vth = jnp.pad(vth, ((0, bins_p - bins), (0, 0)))

    tau = jnp.asarray(tau, jnp.float32)
    v_reset = jnp.asarray(v_reset, jnp.float32)
    scalars = jnp.stack([jnp.float32(1.0) / tau, v_reset])

    kernel = functools.partial(_neuron_kernel, bins_p=bins_p, row_tile=rt)

    spike, v_new, binsum_p, counts_p = pl.pallas_call(
        kernel,
        out_shape=(
            jax.ShapeDtypeStruct((n_pad, s), jnp.float32),             # spike
            jax.ShapeDtypeStruct((n_pad, s), jnp.float32),             # v_new
            jax.ShapeDtypeStruct((num_tiles, bins_p, s), jnp.float32), # partial bin sums
            jax.ShapeDtypeStruct((num_tiles, 1, bins_p), jnp.float32), # partial bin counts
        ),
        grid_spec=pltpu.PrefetchScalarGridSpec(
            num_scalar_prefetch=0,
            grid=(num_tiles,),
            in_specs=[
                pl.BlockSpec(memory_space=pltpu.MemorySpace.SMEM),      # scalars
                pl.BlockSpec((n_pad, 1), lambda i: (0, 0)),             # degrees (resident)
                pl.BlockSpec((rt, s), lambda i: (i, 0)),                # dv
                pl.BlockSpec((rt, s), lambda i: (i, 0)),                # v
                pl.BlockSpec((bins_p, s), lambda i: (0, 0)),            # v_threshold
            ],
            out_specs=[
                pl.BlockSpec((rt, s), lambda i: (i, 0)),                # spike
                pl.BlockSpec((rt, s), lambda i: (i, 0)),                # v_new
                pl.BlockSpec((None, bins_p, s), lambda i: (i, 0, 0)),   # partial bin sums
                pl.BlockSpec((None, 1, bins_p), lambda i: (i, 0, 0)),   # partial bin counts
            ],
        ),
        compiler_params=pltpu.CompilerParams(
            dimension_semantics=("parallel",)),   # no cross-step accumulation -> megacore OK
    )(scalars, deg2d, dv, v, vth)

    bin_sum = jnp.sum(binsum_p, axis=0)[:bins]          # (bins, S)
    counts = jnp.sum(counts_p, axis=0)[0, :bins]        # (bins,)
    return spike[:n], v_new[:n], bin_sum, counts


class DegFeatNeuron:
    """JAX/Pallas port of Deg_feat_neuron (forward pass only, deterministic init)."""

    def __init__(self, ssize=128, tau=1.0, v_threshold=0.25, v_reset=0.0,
                 alpha=1.0, bins=20):
        self.ssize = ssize
        self.bins = bins
        self.tau = jnp.float32(tau)
        self.v_reset = jnp.float32(v_reset)
        self.alpha = jnp.float32(alpha)   # only used by surrogate backward (not implemented)
        # nn.Parameter of shape (bins, ssize), every entry = v_threshold
        self.v_threshold = jnp.full((bins, ssize), v_threshold, dtype=jnp.float32)
        self.training = True
        self.v_threshold_values = []
        self.train_spike_counts = None
        self.train_cur_degree = None
        self.reset()

    def reset(self):
        self.v = 0.0
        self.v_th = self.v_threshold

    def __call__(self, dv, binned_degree, orig_degree=None):
        n, s = dv.shape
        v = (jnp.zeros((n, s), jnp.float32) if isinstance(self.v, float)
             else self.v)

        # Spiking threshold is the *parameter* self.v_threshold, exactly as in
        # the PyTorch forward; self.v_th only carries the EMA statistic.
        spike, v_new, bin_sum, counts = deg_feat_neuron_forward(
            dv, v, binned_degree, self.v_threshold, self.tau, self.v_reset)

        self.v = v_new

        # v_th EMA update (torch does this under no_grad); counts come from the kernel.
        safe = jnp.maximum(counts, 1.0)[:, None]
        mean_spike = bin_sum / safe
        present = (counts > 0)[:, None]
        self.v_th = jnp.where(present,
                              GAMMA * mean_spike + (1.0 - GAMMA) * self.v_th,
                              self.v_th)

        if self.training:
            # Keep the device scalar -- no device->host sync per step.
            self.v_threshold_values.append(jnp.mean(self.v_th))

        # update_spike_counts
        self.train_cur_degree = orig_degree
        if self.train_spike_counts is None:
            self.train_spike_counts = spike
        else:
            self.train_spike_counts = self.train_spike_counts + spike

        # TODO(synk): surrogate backward (sigmoid/arctan/triangle/super gradients)
        # is not implemented; forward uses the hard step, as in BaseSpike.forward.
        return spike


def _reference(dv, v, binned_degree, v_threshold, tau, v_reset):
    thresh = v_threshold[binned_degree]                     # (N, S)
    v1 = v + (dv - (v - v_reset)) / tau
    spike = (v1 - thresh > 0).astype(jnp.float32)
    v_new = (1.0 - spike) * v1 + spike * v_reset
    bin_sum = jnp.zeros_like(v_threshold).at[binned_degree].add(spike)
    counts = jnp.zeros((v_threshold.shape[0],), jnp.float32).at[binned_degree].add(1.0)
    return spike, v_new, bin_sum, counts


if __name__ == "__main__":
    key = jax.random.PRNGKey(0)
    N, S, BINS = 64, 128, 20

    k1, k2 = jax.random.split(key)
    dv = jax.random.normal(k1, (N, S), dtype=jnp.float32)
    binned_degree = jax.random.randint(k2, (N,), 0, BINS, dtype=jnp.int32)
    orig_degree = binned_degree * 3 + 1

    neuron = DegFeatNeuron(ssize=S, tau=1.0, v_threshold=0.25, v_reset=0.0,
                           alpha=1.0, bins=BINS)

    v0 = jnp.zeros((N, S), jnp.float32)
    spike_k, v_k, bsum_k, cnt_k = deg_feat_neuron_forward(
        dv, v0, binned_degree, neuron.v_threshold, neuron.tau, neuron.v_reset)
    jax.block_until_ready((spike_k, v_k, bsum_k, cnt_k))

    spike_r, v_r, bsum_r, cnt_r = _reference(dv, v0, binned_degree, neuron.v_threshold,
                                             neuron.tau, neuron.v_reset)
    assert jnp.allclose(spike_k, spike_r), "spike mismatch"
    assert jnp.allclose(v_k, v_r, atol=1e-6), "v mismatch"
    assert jnp.allclose(bsum_k, bsum_r, atol=1e-5), "per-bin spike sum mismatch"
    assert jnp.allclose(cnt_k, cnt_r), "per-bin count mismatch"

    # Full stateful forward twice (v, v_th EMA and spike counters evolve).
    out1 = neuron(dv, binned_degree, orig_degree)
    out2 = neuron(dv, binned_degree, orig_degree)
    jax.block_until_ready((out1, out2, neuron.v, neuron.v_th, neuron.train_spike_counts))

    print("KERNEL_OK")
</pallas_src>

<mosaic_0001>
module attributes {stable_mosaic.version = 11 : i64} {
  func.func @_neuron_kernel(%arg0: i32, %arg1: memref<2xf32, #tpu.memory_space<smem>>, %arg2: memref<64x1xi32, #tpu.memory_space<vmem>>, %arg3: memref<64x128xf32, #tpu.memory_space<vmem>>, %arg4: memref<64x128xf32, #tpu.memory_space<vmem>>, %arg5: memref<24x128xf32, #tpu.memory_space<vmem>>, %arg6: memref<64x128xf32, #tpu.memory_space<vmem>>, %arg7: memref<64x128xf32, #tpu.memory_space<vmem>>, %arg8: memref<1x24x128xf32, #tpu.memory_space<vmem>>, %arg9: memref<1x1x24xf32, #tpu.memory_space<vmem>>) attributes {dimension_semantics = [#tpu.dimension_semantics<parallel>], iteration_bounds = array<i64: 1>, scalar_prefetch = 0 : i64, scratch_operands = 0 : i64, tpu.core_type = #tpu.core_type<tc>, window_params = [{transform_indices = @transform_0, window_bounds = array<i64: 2>}, {pipeline_mode = #tpu.pipeline_mode<synchronous>, transform_indices = @transform_1, window_bounds = array<i64: 64, 1>}, {transform_indices = @transform_2, window_bounds = array<i64: 64, 128>}, {transform_indices = @transform_3, window_bounds = array<i64: 64, 128>}, {pipeline_mode = #tpu.pipeline_mode<synchronous>, transform_indices = @transform_4, window_bounds = array<i64: 24, 128>}, {transform_indices = @transform_5, window_bounds = array<i64: 64, 128>}, {transform_indices = @transform_6, window_bounds = array<i64: 64, 128>}, {transform_indices = @transform_7, window_bounds = array<i64: 1, 24, 128>}, {transform_indices = @transform_8, window_bounds = array<i64: 1, 1, 24>}]} {
    %c0 = arith.constant 0 : index
    %0 = memref.load %arg1[%c0] : memref<2xf32, #tpu.memory_space<smem>>
    %c1 = arith.constant 1 : index
    %1 = memref.load %arg1[%c1] : memref<2xf32, #tpu.memory_space<smem>>
    %c64_i32 = arith.constant 64 : i32
    %2 = arith.muli %arg0, %c64_i32 : i32
    %3 = tpu.assume_multiple %2, 64 : i32
    %4 = arith.index_cast %3 : i32 to index
    %c0_0 = arith.constant 0 : index
    %5 = vector.load %arg2[%4, %c0_0] : memref<64x1xi32, #tpu.memory_space<vmem>>, vector<64x1xi32>
    %6 = tpu.iota {dimensions = array<i32: 1>} : vector<64x24xi32>
    %7 = vector.broadcast %5 : vector<64x1xi32> to vector<64x24xi32>
    %8 = arith.cmpi eq, %7, %6 : vector<64x24xi32>
    %9 = arith.extui %8 : vector<64x24xi1> to vector<64x24xi32>
    %10 = arith.sitofp %9 : vector<64x24xi32> to vector<64x24xf32>
    %c0_1 = arith.constant 0 : index
    %c0_2 = arith.constant 0 : index
    %11 = vector.load %arg5[%c0_1, %c0_2] : memref<24x128xf32, #tpu.memory_space<vmem>>, vector<24x128xf32>
    %cst = arith.constant dense<0.000000e+00> : vector<64x128xf32>
    %12 = tpu.matmul %10, %11, %cst {dimension_numbers = #tpu.dot_dimension_numbers<[1], [0], [0], [1], [0, 0, 1, 1], [], []>} : vector<64x24xf32>, vector<24x128xf32>, vector<64x128xf32> -> vector<64x128xf32>
    %c0_3 = arith.constant 0 : index
    %c0_4 = arith.constant 0 : index
    %13 = vector.load %arg4[%c0_3, %c0_4] : memref<64x128xf32, #tpu.memory_space<vmem>>, vector<64x128xf32>
    %c0_5 = arith.constant 0 : index
    %c0_6 = arith.constant 0 : index
    %14 = vector.load %arg3[%c0_5, %c0_6] : memref<64x128xf32, #tpu.memory_space<vmem>>, vector<64x128xf32>
    %15 = arith.subf %14, %13 : vector<64x128xf32>
    %16 = vector.broadcast %1 : f32 to vector<64x128xf32>
    %17 = arith.addf %15, %16 : vector<64x128xf32>
    %18 = vector.broadcast %0 : f32 to vector<64x128xf32>
    %19 = arith.mulf %17, %18 : vector<64x128xf32>
    %20 = arith.addf %13, %19 : vector<64x128xf32>
    %21 = arith.cmpf ogt, %20, %12 : vector<64x128xf32>
    %22 = arith.extui %21 : vector<64x128xi1> to vector<64x128xi32>
    %23 = arith.sitofp %22 : vector<64x128xi32> to vector<64x128xf32>
    %24 = vector.broadcast %1 : f32 to vector<64x128xf32>
    %25 = arith.select %21, %24, %20 : vector<64x128xi1>, vector<64x128xf32>
    %c0_7 = arith.constant 0 : index
    %c0_8 = arith.constant 0 : index
    %26 = vector.load %arg6[%c0_7, %c0_8] : memref<64x128xf32, #tpu.memory_space<vmem>>, vector<64x128xf32>
    tpu.vector_store %arg6[%c0_7, %c0_8], %23 {strides = array<i32>} : memref<64x128xf32, #tpu.memory_space<vmem>>, vector<64x128xf32>,
    %c0_9 = arith.constant 0 : index
    %c0_10 = arith.constant 0 : index
    %27 = vector.load %arg7[%c0_9, %c0_10] : memref<64x128xf32, #tpu.memory_space<vmem>>, vector<64x128xf32>
    tpu.vector_store %arg7[%c0_9, %c0_10], %25 {strides = array<i32>} : memref<64x128xf32, #tpu.memory_space<vmem>>, vector<64x128xf32>,
    %cst_11 = arith.constant dense<0.000000e+00> : vector<24x128xf32>
    %28 = tpu.matmul %10, %23, %cst_11 {dimension_numbers = #tpu.dot_dimension_numbers<[0], [0], [1], [1], [0, 1, 1, 1], [], []>} : vector<64x24xf32>, vector<64x128xf32>, vector<24x128xf32> -> vector<24x128xf32>
    %c0_12 = arith.constant 0 : index
    %c0_13 = arith.constant 0 : index
    %c0_14 = arith.constant 0 : index
    %29 = vector.load %arg8[%c0_12, %c0_13, %c0_14] : memref<1x24x128xf32, #tpu.memory_space<vmem>>, vector<1x24x128xf32>
    %30 = vector.shape_cast %29 : vector<1x24x128xf32> to vector<24x128xf32>
    %31 = vector.shape_cast %28 : vector<24x128xf32> to vector<1x24x128xf32>
    tpu.vector_store %arg8[%c0_12, %c0_13, %c0_14], %31 {strides = array<i32>} : memref<1x24x128xf32, #tpu.memory_space<vmem>>, vector<1x24x128xf32>,
    %cst_15 = arith.constant dense<0.000000e+00> : vector<24xf32>
    %32 = vector.multi_reduction <add>, %10, %cst_15 [0] : vector<64x24xf32> to vector<24xf32>
    %33 = vector.shape_cast %32 : vector<24xf32> to vector<1x24xf32>
    %c0_16 = arith.constant 0 : index
    %c0_17 = arith.constant 0 : index
    %c0_18 = arith.constant 0 : index
    %34 = vector.load %arg9[%c0_16, %c0_17, %c0_18] : memref<1x1x24xf32, #tpu.memory_space<vmem>>, vector<1x1x24xf32>
    %35 = vector.shape_cast %34 : vector<1x1x24xf32> to vector<1x24xf32>
    %36 = vector.shape_cast %33 : vector<1x24xf32> to vector<1x1x24xf32>
    tpu.vector_store %arg9[%c0_16, %c0_17, %c0_18], %36 {strides = array<i32>} : memref<1x1x24xf32, #tpu.memory_space<vmem>>, vector<1x1x24xf32>,
    return
  }
  func.func @transform_0(%arg0: i32) -> i32 {
    %c0_i32 = arith.constant 0 : i32
    %c0_i32_0 = arith.constant 0 : i32
    return %c0_i32 : i32
  }
  func.func @transform_1(%arg0: i32) -> (i32, i32) {
    %c0_i32 = arith.constant 0 : i32
    %c0_i32_0 = arith.constant 0 : i32
    %c0_i32_1 = arith.constant 0 : i32
    return %c0_i32, %c0_i32_0 : i32, i32
  }
  func.func @transform_2(%arg0: i32) -> (i32, i32) {
    %c0_i32 = arith.constant 0 : i32
    %c0_i32_0 = arith.constant 0 : i32
    return %arg0, %c0_i32 : i32, i32
  }
  func.func @transform_3(%arg0: i32) -> (i32, i32) {
    %c0_i32 = arith.constant 0 : i32
    %c0_i32_0 = arith.constant 0 : i32
    return %arg0, %c0_i32 : i32, i32
  }
  func.func @transform_4(%arg0: i32) -> (i32, i32) {
    %c0_i32 = arith.constant 0 : i32
    %c0_i32_0 = arith.constant 0 : i32
    %c0_i32_1 = arith.constant 0 : i32
    return %c0_i32, %c0_i32_0 : i32, i32
  }
  func.func @transform_5(%arg0: i32) -> (i32, i32) {
    %c0_i32 = arith.constant 0 : i32
    %c0_i32_0 = arith.constant 0 : i32
    return %arg0, %c0_i32 : i32, i32
  }
  func.func @transform_6(%arg0: i32) -> (i32, i32) {
    %c0_i32 = arith.constant 0 : i32
    %c0_i32_0 = arith.constant 0 : i32
    return %arg0, %c0_i32 : i32, i32
  }
  func.func @transform_7(%arg0: i32) -> (i32, i32, i32) {
    %c0_i32 = arith.constant 0 : i32
    %c0_i32_0 = arith.constant 0 : i32
    %c0_i32_1 = arith.constant 0 : i32
    return %arg0, %c0_i32, %c0_i32_0 : i32, i32, i32
  }
  func.func @transform_8(%arg0: i32) -> (i32, i32, i32) {
    %c0_i32 = arith.constant 0 : i32
    %c0_i32_0 = arith.constant 0 : i32
    %c0_i32_1 = arith.constant 0 : i32
    return %arg0, %c0_i32, %c0_i32_0 : i32, i32, i32
  }
}

</mosaic_0001>

<llo_original>
// kernel: deg_feat_neuron_forward.1
$region0: #{deg_feat_neuron_forward.1}
  #allocation0 [shape = 'u32[]', space=smem, size = 0x4, offset = 0x4, fixed_abs, tag = 'smem constant byte address 0x4 - core index']
  #allocation1 [shape = 'u32[144,128]{1,0:T(1,128)}', space=vmem, size = 0x12000, scoped, tag = 'internal scratch']
  %s0 = inlined_call_operand.vmem [shape: f32[2], index: 0, kind: input, shape index: {}]
  %s1 = inlined_call_operand.vmem [shape: s32[64,1], index: 1, kind: input, shape index: {}]
  %s2 = inlined_call_operand.vmem [shape: f32[64,128], index: 2, kind: input, shape index: {}]
  %s3 = inlined_call_operand.vmem [shape: f32[64,128], index: 3, kind: input, shape index: {}]
  %s4 = inlined_call_operand.vmem [shape: f32[24,128], index: 4, kind: input, shape index: {}]
  %s5 = inlined_call_operand.hbm [shape: f32[64,128], index: 5, kind: output, shape index: {0}]
  %s6 = inlined_call_operand.hbm [shape: f32[64,128], index: 6, kind: output, shape index: {1}]
  %s7 = inlined_call_operand.vmem [shape: f32[1,24,128], index: 7, kind: output, shape index: {2}]
  %s8 = inlined_call_operand.vmem [shape: f32[1,1,24], index: 8, kind: output, shape index: {3}]
  %9 = xla_tuple %s5, %s6, %s7, %s8
  %s10 = sld [smem:[#allocation0]]
  $region58: #{deg_feat_neuron_forward.1} parent=0
    _
  %s12 = ssub.s32 1, %s10
  %s13 = scalar_select 0, %s12, %s10
  $region1: #{deg_feat_neuron_forward.1} parent=0
    #allocation2 [shape = 'u8[512]{0}', space=smem, size = 0x200, scoped, tag = 'input window, operand 0, single buffered']
    #allocation3 [shape = 's32[1]{0}', space=sflag, size = 0x4, scoped, tag = 'scoped memory for deg_feat_neuron_forward.1']
    #allocation4 [shape = 's32[1]{0}', space=sflag, size = 0x4, scoped, tag = 'scoped memory for deg_feat_neuron_forward.1']
    #allocation5 [shape = 'u8[32768]{0}', space=vmem, size = 0x8000, scoped, tag = 'output window, operand 0, single buffered']
    #allocation6 [shape = 'u8[32768]{0}', space=vmem, size = 0x8000, scoped, tag = 'output window, operand 1, single buffered']
    #allocation7 [shape = 's32[1]{0}', space=sflag, size = 0x4, scoped, tag = 'scoped memory for deg_feat_neuron_forward.1']
    %14 = vsyncpa [#allocation4], 0
    %15 = vsyncpa [#allocation3], 0
    %16 = vsyncpa [#allocation7], 0
    // Predicated region
    $region2: #{deg_feat_neuron_forward.1} parent=1 // pred_check
      _
    $region3: #{deg_feat_neuron_forward.1} parent=1 // pred_check_branch
      %18 = sbr.rel (0) target = $region5
    $region4: #{deg_feat_neuron_forward.1} parent=1 // pred_region
      %s20 = ssub.s32 16, 16
      %21 = vsyncadd [#allocation4], %s20
      %s23 = sshll.u32 %s0, 4
      %s24 = int_to_ptr.vmem [resolvable:$true] %s23
      %26 = dma.vmem_to_smem %s24, 16, [#allocation2], [#allocation4]
    $region5: #{deg_feat_neuron_forward.1} parent=1 // pred_fallthru
      _
    // Predicated region
    $region6: #{deg_feat_neuron_forward.1} parent=1 // pred_check
      _
    $region7: #{deg_feat_neuron_forward.1} parent=1 // pred_check_branch
      %28 = sbr.rel (0) target = $region9
    $region8: #{deg_feat_neuron_forward.1} parent=1 // pred_region
      _
    $region9: #{deg_feat_neuron_forward.1} parent=1 // pred_fallthru
      _
    // Predicated region
    $region10: #{deg_feat_neuron_forward.1} parent=1 // pred_check
      _
    $region11: #{deg_feat_neuron_forward.1} parent=1 // pred_check_branch
      %30 = sbr.rel (0) target = $region13
    $region12: #{deg_feat_neuron_forward.1} parent=1 // pred_region
      _
    $region13: #{deg_feat_neuron_forward.1} parent=1 // pred_fallthru
      _
    // Predicated region
    $region14: #{deg_feat_neuron_forward.1} parent=1 // pred_check
      _
    $region15: #{deg_feat_neuron_forward.1} parent=1 // pred_check_branch
      %32 = sbr.rel (0) target = $region17
    $region16: #{deg_feat_neuron_forward.1} parent=1 // pred_region
      _
    $region17: #{deg_feat_neuron_forward.1} parent=1 // pred_fallthru
      _
    // Predicated region
    $region18: #{deg_feat_neuron_forward.1} parent=1 // pred_check
      _
    $region19: #{deg_feat_neuron_forward.1} parent=1 // pred_check_branch
      %34 = sbr.rel (0) target = $region21
    $region20: #{deg_feat_neuron_forward.1} parent=1 // pred_region
      _
    $region21: #{deg_feat_neuron_forward.1} parent=1 // pred_fallthru
      _
    // Predicated region
    $region22: #{deg_feat_neuron_forward.1} parent=1 // pred_check
      _
    $region23: #{deg_feat_neuron_forward.1} parent=1 // pred_check_branch
      %36 = sbr.rel (0) target = $region25
    $region24: #{deg_feat_neuron_forward.1} parent=1 // pred_region
      %37 = dma.done [#allocation4], 16
    $region25: #{deg_feat_neuron_forward.1} parent=1 // pred_fallthru
      _
    %38 = sfence
    %s39 = sld [smem:[#allocation2]]
    %s40 = sld [smem:[#allocation2 + $0x1]]
    %s41 = smul.u32 0, 64
    %s42 = scalar_lea.vmem %s1, %s41
    %v43 = vld [vmem:[%s42] sm:$0xff]
    %v44 = vld [vmem:[%s42 + $0x8] sm:$0xff]
    %v45 = vld [vmem:[%s42 + $0x10] sm:$0xff]
    %v46 = vld [vmem:[%s42 + $0x18] sm:$0xff]
    %v47 = vld [vmem:[%s42 + $0x20] sm:$0xff]
    %v48 = vld [vmem:[%s42 + $0x28] sm:$0xff]
    %v49 = vld [vmem:[%s42 + $0x30] sm:$0xff]
    %v50 = vld [vmem:[%s42 + $0x38] sm:$0xff]
    %v51 = vlaneseq
    %v52 = vand.u32 %v51, 127
    %53 = vset.pattern.permute.xlu0 0
    %54 = vperm.xlu0 %53, %v43
    %v55 = vpop.permute.xlu0 %54
    %56 = vset.pattern.permute.xlu0 0
    %57 = vperm.xlu0 %56, %v44
    %v58 = vpop.permute.xlu0 %57
    %59 = vset.pattern.permute.xlu0 0
    %60 = vperm.xlu0 %59, %v45
    %v61 = vpop.permute.xlu0 %60
    %62 = vset.pattern.permute.xlu0 0
    %63 = vperm.xlu0 %62, %v46
    %v64 = vpop.permute.xlu0 %63
    %65 = vset.pattern.permute.xlu0 0
    %66 = vperm.xlu0 %65, %v47
    %v67 = vpop.permute.xlu0 %66
    %68 = vset.pattern.permute.xlu0 0
    %69 = vperm.xlu0 %68, %v48
    %v70 = vpop.permute.xlu0 %69
    %71 = vset.pattern.permute.xlu0 0
    %72 = vperm.xlu0 %71, %v49
    %v73 = vpop.permute.xlu0 %72
    %74 = vset.pattern.permute.xlu0 0
    %75 = vperm.xlu0 %74, %v50
    %v76 = vpop.permute.xlu0 %75
    %vm77 = vcmp.eq.s32.totalorder %v55, %v52
    %vm78 = vcmp.eq.s32.totalorder %v58, %v52
    %vm79 = vcmp.eq.s32.totalorder %v61, %v52
    %vm80 = vcmp.eq.s32.totalorder %v64, %v52
    %vm81 = vcmp.eq.s32.totalorder %v67, %v52
    %vm82 = vcmp.eq.s32.totalorder %v70, %v52
    %vm83 = vcmp.eq.s32.totalorder %v73, %v52
    %vm84 = vcmp.eq.s32.totalorder %v76, %v52
    %v85 = vsel %vm77, 1, 0
    %v86 = vsel %vm78, 1, 0
    %v87 = vsel %vm79, 1, 0
    %v88 = vsel %vm80, 1, 0
    %v89 = vsel %vm81, 1, 0
    %v90 = vsel %vm82, 1, 0
    %v91 = vsel %vm83, 1, 0
    %v92 = vsel %vm84, 1, 0
    %v93 = vcvt.s32.f32 %v85
    %v94 = vcvt.s32.f32 %v86
    %v95 = vcvt.s32.f32 %v87
    %v96 = vcvt.s32.f32 %v88
    %v97 = vcvt.s32.f32 %v89
    %v98 = vcvt.s32.f32 %v90
    %v99 = vcvt.s32.f32 %v91
    %v100 = vcvt.s32.f32 %v92
    %v101 = vld [vmem:[%s4] sm:$0xff]
    %v102 = vld [vmem:[%s4 + $0x8] sm:$0xff]
    %v103 = vld [vmem:[%s4 + $0x10] sm:$0xff]
    %vm104 = vcmask 195584
    %v106 = vsel %vm104, %v93, 0
    %v109 = vsel %vm104, %v94, 0
    %v112 = vsel %vm104, %v95, 0
    %v115 = vsel %vm104, %v96, 0
    %v118 = vsel %vm104, %v97, 0
    %v121 = vsel %vm104, %v98, 0
    %v124 = vsel %vm104, %v99, 0
    %v127 = vsel %vm104, %v100, 0
    %129 = vmatprep.subr.mxu0 0.0
    %130 = vmatpush1.msra.mxu0 %v101
    %131 = vmatprep.subr.mxu0 0.0
    %132 = vmatpush1.msra.mxu0 %v102
    %133 = vmatprep.subr.mxu0 0.0
    %134 = vmatpush1.msra.mxu0 %v103
    %135 = vmatprep.subr.mxu0 0.0
    %136 = vmatpush1.msra.mxu0 0.0
    %137 = vmatprep.subr.mxu0 0.0
    %138 = vmatpush1.msra.mxu0 0.0
    %139 = vmatprep.subr.mxu0 0.0
    %140 = vmatpush1.msra.mxu0 0.0
    %141 = vmatprep.subr.mxu0 0.0
    %142 = vmatpush1.msra.mxu0 0.0
    %143 = vmatprep.subr.mxu0 0.0
    %144 = vmatpush1.msra.mxu0 0.0
    %145 = vmatprep.subr.mxu0 0.0
    %146 = vmatpush1.msra.mxu0 0.0
    %147 = vmatprep.subr.mxu0 0.0
    %148 = vmatpush1.msra.mxu0 0.0
    %149 = vmatprep.subr.mxu0 0.0
    %150 = vmatpush1.msra.mxu0 0.0
    %151 = vmatprep.subr.mxu0 0.0
    %152 = vmatpush1.msra.mxu0 0.0
    %153 = vmatprep.subr.mxu0 0.0
    %154 = vmatpush1.msra.mxu0 0.0
    %155 = vmatprep.subr.mxu0 0.0
    %156 = vmatpush1.msra.mxu0 0.0
    %157 = vmatprep.subr.mxu0 0.0
    %158 = vmatpush1.msra.mxu0 0.0
    %159 = vmatprep.subr.mxu0 0.0
    %160 = vmatpush1.msra.mxu0 0.0
    %161 = vmatprep.subr.mxu0 0.0
    %162 = vmatpush1.msra.mxu0 0.0
    %163 = vmatprep.subr.mxu0 0.0
    %164 = vmatpush1.msra.mxu0 0.0
    %165 = vmatprep.subr.mxu0 0.0
    %166 = vmatpush1.msra.mxu0 0.0
    %167 = vmatprep.subr.mxu0 0.0
    %168 = vmatpush1.msra.mxu0 0.0
    %169 = vmatprep.subr.mxu0 0.0
    %170 = vmatpush1.msra.mxu0 0.0
    %171 = vmatprep.subr.mxu0 0.0
    %172 = vmatpush1.msra.mxu0 0.0
    %173 = vmatprep.subr.mxu0 0.0
    %174 = vmatpush1.msra.mxu0 0.0
    %175 = vmatprep.subr.mxu0 0.0
    %176 = vmatpush1.msra.mxu0 0.0
    %177 = vmatprep.subr.mxu0 0.0
    %178 = vmatpush1.msra.mxu0 0.0
    %179 = vmatprep.subr.mxu0 0.0
    %180 = vmatpush1.msra.mxu0 0.0
    %181 = vmatprep.subr.mxu0 0.0
    %182 = vmatpush1.msra.mxu0 0.0
    %183 = vmatprep.subr.mxu0 0.0
    %184 = vmatpush1.msra.mxu0 0.0
    %185 = vmatprep.subr.mxu0 0.0
    %186 = vmatpush1.msra.mxu0 0.0
    %187 = vmatprep.subr.mxu0 0.0
    %188 = vmatpush1.msra.mxu0 0.0
    %189 = vmatprep.subr.mxu0 0.0
    %190 = vmatpush1.msra.mxu0 0.0
    %191 = vmatprep.subr.mxu0 0.0
    %192 = vmatpush1.msra.mxu0 0.0
    %193 = vmatprep.mubr.f32.mxu0 0.0
    %194 = vmatmul.mubr.f32.gmra.mrb[0].mxu0 %v106
    %v195 = vpop.f32.mrb[0].mxu0
    %v196 = vadd.f32 0.0, %v195
    %v197 = vpop.f32.mrb[0].mxu0
    %198 = vmatprep.mubr.f32.mxu0 0.0
    %199 = vmatmul.mubr.f32.gmra.mrb[0].mxu0 %v109
    %v200 = vpop.f32.mrb[0].mxu0
    %v201 = vadd.f32 0.0, %v200
    %v202 = vpop.f32.mrb[0].mxu0
    %203 = vmatprep.mubr.f32.mxu0 0.0
    %204 = vmatmul.mubr.f32.gmra.mrb[0].mxu0 %v112
    %v205 = vpop.f32.mrb[0].mxu0
    %v206 = vadd.f32 0.0, %v205
    %v207 = vpop.f32.mrb[0].mxu0
    %208 = vmatprep.mubr.f32.mxu0 0.0
    %209 = vmatmul.mubr.f32.gmra.mrb[0].mxu0 %v115
    %v210 = vpop.f32.mrb[0].mxu0
    %v211 = vadd.f32 0.0, %v210
    %v212 = vpop.f32.mrb[0].mxu0
    %213 = vmatprep.mubr.f32.mxu0 0.0
    %214 = vmatmul.mubr.f32.gmra.mrb[0].mxu0 %v118
    %v215 = vpop.f32.mrb[0].mxu0
    %v216 = vadd.f32 0.0, %v215
    %v217 = vpop.f32.mrb[0].mxu0
    %218 = vmatprep.mubr.f32.mxu0 0.0
    %219 = vmatmul.mubr.f32.gmra.mrb[0].mxu0 %v121
    %v220 = vpop.f32.mrb[0].mxu0
    %v221 = vadd.f32 0.0, %v220
    %v222 = vpop.f32.mrb[0].mxu0
    %223 = vmatprep.mubr.f32.mxu0 0.0
    %224 = vmatmul.mubr.f32.gmra.mrb[0].mxu0 %v124
    %v225 = vpop.f32.mrb[0].mxu0
    %v226 = vadd.f32 0.0, %v225
    %v227 = vpop.f32.mrb[0].mxu0
    %228 = vmatprep.mubr.f32.mxu0 0.0
    %229 = vmatmul.mubr.f32.gmra.mrb[0].mxu0 %v127
    %v230 = vpop.f32.mrb[0].mxu0
    %v231 = vadd.f32 0.0, %v230
    %v232 = vpop.f32.mrb[0].mxu0
    %233 = vdwg.mxu0
    %v234 = vld [vmem:[%s3] sm:$0xff]
    %v235 = vld [vmem:[%s3 + $0x8] sm:$0xff]
    %v236 = vld [vmem:[%s3 + $0x10] sm:$0xff]
    %v237 = vld [vmem:[%s3 + $0x18] sm:$0xff]
    %v238 = vld [vmem:[%s3 + $0x20] sm:$0xff]
    %v239 = vld [vmem:[%s3 + $0x28] sm:$0xff]
    %v240 = vld [vmem:[%s3 + $0x30] sm:$0xff]
    %v241 = vld [vmem:[%s3 + $0x38] sm:$0xff]
    %v242 = vld [vmem:[%s2] sm:$0xff]
    %v243 = vld [vmem:[%s2 + $0x8] sm:$0xff]
    %v244 = vld [vmem:[%s2 + $0x10] sm:$0xff]
    %v245 = vld [vmem:[%s2 + $0x18] sm:$0xff]
    %v246 = vld [vmem:[%s2 + $0x20] sm:$0xff]
    %v247 = vld [vmem:[%s2 + $0x28] sm:$0xff]
    %v248 = vld [vmem:[%s2 + $0x30] sm:$0xff]
    %v249 = vld [vmem:[%s2 + $0x38] sm:$0xff]
    %v250 = vsub.f32 %v242, %v234
    %v251 = vsub.f32 %v243, %v235
    %v252 = vsub.f32 %v244, %v236
    %v253 = vsub.f32 %v245, %v237
    %v254 = vsub.f32 %v246, %v238
    %v255 = vsub.f32 %v247, %v239
    %v256 = vsub.f32 %v248, %v240
    %v257 = vsub.f32 %v249, %v241
    %v258 = vstv %s40
    %v259 = vadd.f32 %v250, %v258
    %v260 = vadd.f32 %v251, %v258
    %v261 = vadd.f32 %v252, %v258
    %v262 = vadd.f32 %v253, %v258
    %v263 = vadd.f32 %v254, %v258
    %v264 = vadd.f32 %v255, %v258
    %v265 = vadd.f32 %v256, %v258
    %v266 = vadd.f32 %v257, %v258
    %v267 = vstv %s39
    %v268 = vmul.f32 %v259, %v267
    %v269 = vmul.f32 %v260, %v267
    %v270 = vmul.f32 %v261, %v267
    %v271 = vmul.f32 %v262, %v267
    %v272 = vmul.f32 %v263, %v267
    %v273 = vmul.f32 %v264, %v267
    %v274 = vmul.f32 %v265, %v267
    %v275 = vmul.f32 %v266, %v267
    %v276 = vadd.f32 %v234, %v268
    %v277 = vadd.f32 %v235, %v269
    %v278 = vadd.f32 %v236, %v270
    %v279 = vadd.f32 %v237, %v271
    %v280 = vadd.f32 %v238, %v272
    %v281 = vadd.f32 %v239, %v273
    %v282 = vadd.f32 %v240, %v274
    %v283 = vadd.f32 %v241, %v275
    %vm284 = vcmp.gt.f32.partialorder %v276, %v196
    %vm285 = vcmp.gt.f32.partialorder %v277, %v201
    %vm286 = vcmp.gt.f32.partialorder %v278, %v206
    %vm287 = vcmp.gt.f32.partialorder %v279, %v211
    %vm288 = vcmp.gt.f32.partialorder %v280, %v216
    %vm289 = vcmp.gt.f32.partialorder %v281, %v221
    %vm290 = vcmp.gt.f32.partialorder %v282, %v226
    %vm291 = vcmp.gt.f32.partialorder %v283, %v231
    %v292 = vsel %vm284, 1, 0
    %v293 = vsel %vm285, 1, 0
    %v294 = vsel %vm286, 1, 0
    %v295 = vsel %vm287, 1, 0
    %v296 = vsel %vm288, 1, 0
    %v297 = vsel %vm289, 1, 0
    %v298 = vsel %vm290, 1, 0
    %v299 = vsel %vm291, 1, 0
    %v300 = vcvt.s32.f32 %v292
    %v301 = vcvt.s32.f32 %v293
    %v302 = vcvt.s32.f32 %v294
    %v303 = vcvt.s32.f32 %v295
    %v304 = vcvt.s32.f32 %v296
    %v305 = vcvt.s32.f32 %v297
    %v306 = vcvt.s32.f32 %v298
    %v307 = vcvt.s32.f32 %v299
    %v308 = vsel %vm284, %v258, %v276
    %v309 = vsel %vm285, %v258, %v277
    %v310 = vsel %vm286, %v258, %v278
    %v311 = vsel %vm287, %v258, %v279
    %v312 = vsel %vm288, %v258, %v280
    %v313 = vsel %vm289, %v258, %v281
    %v314 = vsel %vm290, %v258, %v282
    %v315 = vsel %vm291, %v258, %v283
    %316 = vst [vmem:[#allocation5] sm:$0xff] %v300
    %317 = vst [vmem:[#allocation5 + $0x8] sm:$0xff] %v301
    %318 = vst [vmem:[#allocation5 + $0x10] sm:$0xff] %v302
    %319 = vst [vmem:[#allocation5 + $0x18] sm:$0xff] %v303
    %320 = vst [vmem:[#allocation5 + $0x20] sm:$0xff] %v304
    %321 = vst [vmem:[#allocation5 + $0x28] sm:$0xff] %v305
    %322 = vst [vmem:[#allocation5 + $0x30] sm:$0xff] %v306
    %323 = vst [vmem:[#allocation5 + $0x38] sm:$0xff] %v307
    %324 = vst [vmem:[#allocation6] sm:$0xff] %v308
    %325 = vst [vmem:[#allocation6 + $0x8] sm:$0xff] %v309
    %326 = vst [vmem:[#allocation6 + $0x10] sm:$0xff] %v310
    %327 = vst [vmem:[#allocation6 + $0x18] sm:$0xff] %v311
    %328 = vst [vmem:[#allocation6 + $0x20] sm:$0xff] %v312
    %329 = vst [vmem:[#allocation6 + $0x28] sm:$0xff] %v313
    %330 = vst [vmem:[#allocation6 + $0x30] sm:$0xff] %v314
    %331 = vst [vmem:[#allocation6 + $0x38] sm:$0xff] %v315
    %332 = vxpose.xlu0.b32.start [1/16] %v93, 128
    %333 = vxpose.xlu0.b32.cont [2/16] %v94, 128
    %334 = vxpose.xlu0.b32.cont [3/16] %v95, 128
    %335 = vxpose.xlu0.b32.cont [4/16] %v96, 128
    %336 = vxpose.xlu0.b32.cont [5/16] %v97, 128
    %337 = vxpose.xlu0.b32.cont [6/16] %v98, 128
    %338 = vxpose.xlu0.b32.cont [7/16] %v99, 128
    %339 = vxpose.xlu0.b32.cont [8/16] %v100, 128
    %340 = vxpose.xlu0.b32.cont [9/16] 0.0, 128
    %341 = vxpose.xlu0.b32.cont [10/16] 0.0, 128
    %342 = vxpose.xlu0.b32.cont [11/16] 0.0, 128
    %343 = vxpose.xlu0.b32.cont [12/16] 0.0, 128
    %344 = vxpose.xlu0.b32.cont [13/16] 0.0, 128
    %345 = vxpose.xlu0.b32.cont [14/16] 0.0, 128
    %346 = vxpose.xlu0.b32.cont [15/16] 0.0, 128
    %347 = vxpose.xlu0.b32.end [16/16] 0.0, 128
    %v348 = vpop.trf.xlu0
    %v349 = vpop.trf.xlu0
    %v350 = vpop.trf.xlu0
    %v351 = vpop.trf.xlu0
    %v352 = vpop.trf.xlu0
    %v353 = vpop.trf.xlu0
    %v354 = vpop.trf.xlu0
    %v355 = vpop.trf.xlu0
    %v356 = vpop.trf.xlu0
    %v357 = vpop.trf.xlu0
    %v358 = vpop.trf.xlu0
    %v359 = vpop.trf.xlu0
    %v360 = vpop.trf.xlu0
    %v361 = vpop.trf.xlu0
    %v362 = vpop.trf.xlu0
    %v363 = vpop.trf.xlu0
    %vm364 = vcmask 523264
    %v366 = vsel %vm364, %v348, 0
    %v369 = vsel %vm364, %v349, 0
    %v372 = vsel %vm364, %v350, 0
    %374 = vmatprep.subr.mxu0 0.0
    %375 = vmatpush1.msra.mxu0 %v300
    %376 = vmatprep.subr.mxu0 0.0
    %377 = vmatpush1.msra.mxu0 %v301
    %378 = vmatprep.subr.mxu0 0.0
    %379 = vmatpush1.msra.mxu0 %v302
    %380 = vmatprep.subr.mxu0 0.0
    %381 = vmatpush1.msra.mxu0 %v303
    %382 = vmatprep.subr.mxu0 0.0
    %383 = vmatpush1.msra.mxu0 %v304
    %384 = vmatprep.subr.mxu0 0.0
    %385 = vmatpush1.msra.mxu0 %v305
    %386 = vmatprep.subr.mxu0 0.0
    %387 = vmatpush1.msra.mxu0 %v306
    %388 = vmatprep.subr.mxu0 0.0
    %389 = vmatpush1.msra.mxu0 %v307
    %390 = vmatprep.subr.mxu0 0.0
    %391 = vmatpush1.msra.mxu0 0.0
    %392 = vmatprep.subr.mxu0 0.0
    %393 = vmatpush1.msra.mxu0 0.0
    %394 = vmatprep.subr.mxu0 0.0
    %395 = vmatpush1.msra.mxu0 0.0
    %396 = vmatprep.subr.mxu0 0.0
    %397 = vmatpush1.msra.mxu0 0.0
    %398 = vmatprep.subr.mxu0 0.0
    %399 = vmatpush1.msra.mxu0 0.0
    %400 = vmatprep.subr.mxu0 0.0
    %401 = vmatpush1.msra.mxu0 0.0
    %402 = vmatprep.subr.mxu0 0.0
    %403 = vmatpush1.msra.mxu0 0.0
    %404 = vmatprep.subr.mxu0 0.0
    %405 = vmatpush1.msra.mxu0 0.0
    %406 = vmatprep.subr.mxu0 0.0
    %407 = vmatpush1.msra.mxu0 0.0
    %408 = vmatprep.subr.mxu0 0.0
    %409 = vmatpush1.msra.mxu0 0.0
    %410 = vmatprep.subr.mxu0 0.0
    %411 = vmatpush1.msra.mxu0 0.0
    %412 = vmatprep.subr.mxu0 0.0
    %413 = vmatpush1.msra.mxu0 0.0
    %414 = vmatprep.subr.mxu0 0.0
    %415 = vmatpush1.msra.mxu0 0.0
    %416 = vmatprep.subr.mxu0 0.0
    %417 = vmatpush1.msra.mxu0 0.0
    %418 = vmatprep.subr.mxu0 0.0
    %419 = vmatpush1.msra.mxu0 0.0
    %420 = vmatprep.subr.mxu0 0.0
    %421 = vmatpush1.msra.mxu0 0.0
    %422 = vmatprep.subr.mxu0 0.0
    %423 = vmatpush1.msra.mxu0 0.0
    %424 = vmatprep.subr.mxu0 0.0
    %425 = vmatpush1.msra.mxu0 0.0
    %426 = vmatprep.subr.mxu0 0.0
    %427 = vmatpush1.msra.mxu0 0.0
    %428 = vmatprep.subr.mxu0 0.0
    %429 = vmatpush1.msra.mxu0 0.0
    %430 = vmatprep.subr.mxu0 0.0
    %431 = vmatpush1.msra.mxu0 0.0
    %432 = vmatprep.subr.mxu0 0.0
    %433 = vmatpush1.msra.mxu0 0.0
    %434 = vmatprep.subr.mxu0 0.0
    %435 = vmatpush1.msra.mxu0 0.0
    %436 = vmatprep.subr.mxu0 0.0
    %437 = vmatpush1.msra.mxu0 0.0
    %438 = vmatprep.mubr.f32.mxu0 0.0
    %439 = vmatmul.mubr.f32.gmra.mrb[0].mxu0 %v366
    %v440 = vpop.f32.mrb[0].mxu0
    %v441 = vadd.f32 0.0, %v440
    %v442 = vpop.f32.mrb[0].mxu0
    %443 = vmatprep.mubr.f32.mxu0 0.0
    %444 = vmatmul.mubr.f32.gmra.mrb[0].mxu0 %v369
    %v445 = vpop.f32.mrb[0].mxu0
    %v446 = vadd.f32 0.0, %v445
    %v447 = vpop.f32.mrb[0].mxu0
    %448 = vmatprep.mubr.f32.mxu0 0.0
    %449 = vmatmul.mubr.f32.gmra.mrb[0].mxu0 %v372
    %v450 = vpop.f32.mrb[0].mxu0
    %v451 = vadd.f32 0.0, %v450
    %v452 = vpop.f32.mrb[0].mxu0
    %453 = vdwg.mxu0
    %454 = vst [vmem:[%s7] sm:$0xff] %v441
    %455 = vst [vmem:[%s7 + $0x8] sm:$0xff] %v446
    %456 = vst [vmem:[%s7 + $0x10] sm:$0xff] %v451
    %v457 = vsel %vm104, %v93, 0.0
    %v458 = vsel %vm104, %v94, 0.0
    %v459 = vadd.f32 %v457, %v458
    %v460 = vsel %vm104, %v95, 0.0
    %v461 = vadd.f32 %v459, %v460
    %v462 = vsel %vm104, %v96, 0.0
    %v463 = vadd.f32 %v461, %v462
    %v464 = vsel %vm104, %v97, 0.0
    %v465 = vadd.f32 %v463, %v464
    %v466 = vsel %vm104, %v98, 0.0
    %v467 = vadd.f32 %v465, %v466
    %v468 = vsel %vm104, %v99, 0.0
    %v469 = vadd.f32 %v467, %v468
    %v470 = vsel %vm104, %v100, 0.0
    %v471 = vadd.f32 %v469, %v470
    %v472 = vrot.slane %v471, 4
    %v473 = vadd.f32 %v471, %v472
    %v474 = vrot.slane %v473, 2
    %v475 = vadd.f32 %v473, %v474
    %v476 = vrot.slane %v475, 1
    %v477 = vadd.f32 %v475, %v476
    %vm478 = vcmask 188416
    %479 = vst.msk [vmem:[%s8] sm:$0x1] %vm478, %v477
    // Predicated region
    $region26: #{deg_feat_neuron_forward.1} parent=1 // pred_check
      _
    $region27: #{deg_feat_neuron_forward.1} parent=1 // pred_check_branch
      %481 = sbr.rel (0) target = $region29
    $region28: #{deg_feat_neuron_forward.1} parent=1 // pred_region
      %s483 = ssub.s32 1024, 1024
      %484 = vsyncadd [#allocation3], %s483
      %s485 = sshll.u32 [#allocation5], 4
      %s486 = int_to_ptr.vmem [resolvable:$true] %s485
      %491 = dma.vmem_to_hbm [thread:$0]  %s486, 1024, %s5, [#allocation3], 128, 128, 8
    $region29: #{deg_feat_neuron_forward.1} parent=1 // pred_fallthru
      _
    // Predicated region
    $region30: #{deg_feat_neuron_forward.1} parent=1 // pred_check
      _
    $region31: #{deg_feat_neuron_forward.1} parent=1 // pred_check_branch
      %493 = sbr.rel (0) target = $region33
    $region32: #{deg_feat_neuron_forward.1} parent=1 // pred_region
      %s495 = ssub.s32 1024, 1024
      %496 = vsyncadd [#allocation7], %s495
      %s497 = sshll.u32 [#allocation6], 4
      %s498 = int_to_ptr.vmem [resolvable:$true] %s497
      %503 = dma.vmem_to_hbm [thread:$0]  %s498, 1024, %s6, [#allocation7], 128, 128, 8
    $region33: #{deg_feat_neuron_forward.1} parent=1 // pred_fallthru
      _
    // Predicated region
    $region34: #{deg_feat_neuron_forward.1} parent=1 // pred_check
      _
    $region35: #{deg_feat_neuron_forward.1} parent=1 // pred_check_branch
      %505 = sbr.rel (0) target = $region37
    $region36: #{deg_feat_neuron_forward.1} parent=1 // pred_region
      _
    $region37: #{deg_feat_neuron_forward.1} parent=1 // pred_fallthru
      _
    // Predicated region
    $region38: #{deg_feat_neuron_forward.1} parent=1 // pred_check
      _
    $region39: #{deg_feat_neuron_forward.1} parent=1 // pred_check_branch
      %507 = sbr.rel (0) target = $region41
    $region40: #{deg_feat_neuron_forward.1} parent=1 // pred_region
      _
    $region41: #{deg_feat_neuron_forward.1} parent=1 // pred_fallthru
      _
    // Predicated region
    $region42: #{deg_feat_neuron_forward.1} parent=1 // pred_check
      _
    $region43: #{deg_feat_neuron_forward.1} parent=1 // pred_check_branch
      %509 = sbr.rel (0) target = $region45
    $region44: #{deg_feat_neuron_forward.1} parent=1 // pred_region
      %510 = dma.done [#allocation3], 1024
    $region45: #{deg_feat_neuron_forward.1} parent=1 // pred_fallthru
      _
    // Predicated region
    $region46: #{deg_feat_neuron_forward.1} parent=1 // pred_check
      _
    $region47: #{deg_feat_neuron_forward.1} parent=1 // pred_check_branch
      %512 = sbr.rel (0) target = $region49
    $region48: #{deg_feat_neuron_forward.1} parent=1 // pred_region
      %513 = dma.done [#allocation7], 1024
    $region49: #{deg_feat_neuron_forward.1} parent=1 // pred_fallthru
      _
    // Predicated region
    $region50: #{deg_feat_neuron_forward.1} parent=1 // pred_check
      _
    $region51: #{deg_feat_neuron_forward.1} parent=1 // pred_check_branch
      %515 = sbr.rel (0) target = $region53
    $region52: #{deg_feat_neuron_forward.1} parent=1 // pred_region
      _
    $region53: #{deg_feat_neuron_forward.1} parent=1 // pred_fallthru
      _
    // Predicated region
    $region54: #{deg_feat_neuron_forward.1} parent=1 // pred_check
      _
    $region55: #{deg_feat_neuron_forward.1} parent=1 // pred_check_branch
      %517 = sbr.rel (0) target = $region57
    $region56: #{deg_feat_neuron_forward.1} parent=1 // pred_region
      _
    $region57: #{deg_feat_neuron_forward.1} parent=1 // pred_fallthru
      _
    %518 = vsyncpa [#allocation3], 1
    %519 = vsyncpa [#allocation7], 1
    %520 = vsyncpa [#allocation4], 1

</llo_original>
